<compile_context>
chip_gen: v7x
topology: tpu7x:2x2x1
jax: 0.10.0
libtpu: 0.0.40
codegen_flags: <defaults>
</compile_context>

<pallas_src>
import jax
import jax.numpy as jnp
from jax.experimental import pallas as pl
from jax.experimental.pallas import tpu as pltpu


def _clip4clip_meanpool_kernel(vid_ref, text_ref, w1t_ref, small_ref, out_ref):
    vid = vid_ref[...].astype(jnp.float32)     # (bm, T, E)
    text = text_ref[...].astype(jnp.float32)   # (bm, E)

    # _mean_pooling_for_similarity_visual: sum over frames. The module divides
    # by T unconditionally, but that scale cancels exactly under the L2
    # normalization below, so it is omitted (saves a full-tile VALU multiply).
    vid_agg = jnp.sum(vid, axis=1)                                            # (bm, E)

    # torch .norm(dim=-1, keepdim=True) L2 normalization (rsqrt -> EUP slot).
    vid_n = vid_agg * jax.lax.rsqrt(jnp.sum(vid_agg * vid_agg, axis=-1, keepdims=True))
    txt_n = text * jax.lax.rsqrt(jnp.sum(text * text, axis=-1, keepdims=True))

    b1 = small_ref[0:1, :]      # (1, E)  first Linear bias
    w2 = small_ref[1:2, :]      # (1, E)  second Linear weight row
    b2 = small_ref[2:3, 0:1]    # (1, 1)  second Linear bias

    # final_fc[0]: Linear(2E, E) on cat([text_n, vid_n], -1) as ONE K=2E MXU
    # pass; W1 arrives pre-transposed as (2E, E) = (K, N).
    cat = jnp.concatenate([txt_n, vid_n], axis=-1)                            # (bm, 2E)
    h = jnp.dot(cat, w1t_ref[...], preferred_element_type=jnp.float32) + b1   # (bm, E)
    h = jnp.maximum(h, 0.0)     # ReLU; Dropout(0.5) is identity in eval mode.

    # final_fc[3]: Linear(E, 1) as VPU multiply + lane reduce (an N=1 matmul
    # would use a single MXU output lane and pay MRF drain latency for nothing).
    logits = jnp.sum(h * w2, axis=-1, keepdims=True) + b2                     # (bm, 1)

    # NOTE: (bm, 1) output is a masked (lane-sparse) store; acceptable at this
    # size. At scale, emit batch on lanes or fold into a wider output slab.
    out_ref[...] = jax.nn.sigmoid(logits)


def clip4clip_meanpool_forward(vid_feats, vid_lens, text_feats, params, *, block_b=128):
    """Matches CLIP4Clip(sim_type='meanPool').forward((vid_feats, vid_lens), text_feats).

    The module's meanPool branch ignores vid_lens (divides by T unconditionally),
    so it is carried through the signature but unused.
    """
    del vid_lens
    B, T, E = vid_feats.shape
    w1, b1, w2, b2 = params

    # Plain-JAX glue (free relative to the kernel): pre-transpose W1 to
    # (K=2E, N=E) and pack the small parameters into a single (3, E) slab so
    # the kernel sees 4 input DMAs instead of 7.
    w1_t = jnp.transpose(w1).astype(jnp.float32)               # (2E, E)
    small = jnp.zeros((3, E), jnp.float32)
    small = small.at[0, :].set(b1.astype(jnp.float32))
    small = small.at[1, :].set(w2.reshape(E).astype(jnp.float32))
    small = small.at[2, 0].set(b2.reshape(()).astype(jnp.float32))

    bm = B if B <= block_b else block_b
    assert B % bm == 0, "batch must tile evenly (pad in the caller if needed)"

    out = pl.pallas_call(
        _clip4clip_meanpool_kernel,
        out_shape=jax.ShapeDtypeStruct((B, 1), jnp.float32),
        grid=(B // bm,),
        in_specs=[
            pl.BlockSpec((bm, T, E), lambda i: (i, 0, 0)),   # vid_feats tile
            pl.BlockSpec((bm, E), lambda i: (i, 0)),         # text_feats tile
            pl.BlockSpec((2 * E, E), lambda i: (0, 0)),      # W1^T (stays resident)
            pl.BlockSpec((3, E), lambda i: (0, 0)),          # packed b1 / w2 / b2
        ],
        out_specs=pl.BlockSpec((bm, 1), lambda i: (i, 0)),
        compiler_params=pltpu.CompilerParams(
            dimension_semantics=("parallel",)),
    )(vid_feats, text_feats, w1_t, small)
    return out.reshape(-1)


def _reference(vid_feats, text_feats, params):
    """Pure-JAX transcription of the PyTorch meanPool forward (eval mode)."""
    w1, b1, w2, b2 = params
    vid_agg = jnp.sum(vid_feats, axis=1) / vid_feats.shape[1]
    vid_n = vid_agg / jnp.linalg.norm(vid_agg, axis=-1, keepdims=True)
    txt_n = text_feats / jnp.linalg.norm(text_feats, axis=-1, keepdims=True)
    cat = jnp.concatenate([txt_n, vid_n], axis=-1)
    h = jnp.maximum(cat @ w1.T + b1, 0.0)
    return jax.nn.sigmoid(h @ w2.T + b2).reshape(-1)


def _init_params(key, embed_size):
    """Deterministic synthetic init of final_fc = Linear(2E,E) -> ReLU -> Dropout -> Linear(E,1) -> Sigmoid."""
    k1, k2, k3, k4 = jax.random.split(key, 4)
    E = embed_size
    w1 = jax.random.normal(k1, (E, 2 * E), jnp.float32) * (1.0 / jnp.sqrt(2.0 * E))
    b1 = jax.random.normal(k2, (E,), jnp.float32) * 0.01
    w2 = jax.random.normal(k3, (1, E), jnp.float32) * (1.0 / jnp.sqrt(1.0 * E))
    b2 = jax.random.normal(k4, (1,), jnp.float32) * 0.01
    return (w1, b1, w2, b2)


if __name__ == "__main__":
    B, T, E = 8, 8, 32  # batch, num video frames, embed_size

    key = jax.random.PRNGKey(0)
    kv, kt, kp = jax.random.split(key, 3)
    vid_feats = jax.random.normal(kv, (B, T, E), jnp.float32)
    text_feats = jax.random.normal(kt, (B, E), jnp.float32)
    vid_lens = jnp.full((B,), T, jnp.int32)  # carried through per the module signature
    params = _init_params(kp, E)

    out = clip4clip_meanpool_forward(vid_feats, vid_lens, text_feats, params)
    out = jax.block_until_ready(out)

    ref = jax.block_until_ready(_reference(vid_feats, text_feats, params))
    assert out.shape == (B,)
    assert jnp.allclose(out, ref, atol=1e-5, rtol=1e-5), (out, ref)

    print("KERNEL_OK")
</pallas_src>

<mosaic_0001>
module attributes {stable_mosaic.version = 11 : i64} {
  func.func @_clip4clip_meanpool_kernel(%arg0: i32, %arg1: memref<8x8x32xf32, #tpu.memory_space<vmem>>, %arg2: memref<8x32xf32, #tpu.memory_space<vmem>>, %arg3: memref<64x32xf32, #tpu.memory_space<vmem>>, %arg4: memref<3x32xf32, #tpu.memory_space<vmem>>, %arg5: memref<8x1xf32, #tpu.memory_space<vmem>>) attributes {dimension_semantics = [#tpu.dimension_semantics<parallel>], iteration_bounds = array<i64: 1>, scalar_prefetch = 0 : i64, scratch_operands = 0 : i64, tpu.core_type = #tpu.core_type<tc>, window_params = [{transform_indices = @transform_0, window_bounds = array<i64: 8, 8, 32>}, {transform_indices = @transform_1, window_bounds = array<i64: 8, 32>}, {pipeline_mode = #tpu.pipeline_mode<synchronous>, transform_indices = @transform_2, window_bounds = array<i64: 64, 32>}, {pipeline_mode = #tpu.pipeline_mode<synchronous>, transform_indices = @transform_3, window_bounds = array<i64: 3, 32>}, {transform_indices = @transform_4, window_bounds = array<i64: 8, 1>}]} {
    %c0 = arith.constant 0 : index
    %c0_0 = arith.constant 0 : index
    %c0_1 = arith.constant 0 : index
    %0 = vector.load %arg1[%c0, %c0_0, %c0_1] : memref<8x8x32xf32, #tpu.memory_space<vmem>>, vector<8x8x32xf32>
    %c0_2 = arith.constant 0 : index
    %c0_3 = arith.constant 0 : index
    %1 = vector.load %arg2[%c0_2, %c0_3] : memref<8x32xf32, #tpu.memory_space<vmem>>, vector<8x32xf32>
    %cst = arith.constant dense<0.000000e+00> : vector<8x32xf32>
    %2 = vector.multi_reduction <add>, %0, %cst [1] : vector<8x8x32xf32> to vector<8x32xf32>
    %3 = arith.mulf %2, %2 : vector<8x32xf32>
    %cst_4 = arith.constant dense<0.000000e+00> : vector<8xf32>
    %4 = vector.multi_reduction <add>, %3, %cst_4 [1] : vector<8x32xf32> to vector<8xf32>
    %5 = vector.shape_cast %4 : vector<8xf32> to vector<8x1xf32>
    %6 = math.rsqrt %5 : vector<8x1xf32>
    %7 = vector.broadcast %6 : vector<8x1xf32> to vector<8x32xf32>
    %8 = arith.mulf %2, %7 : vector<8x32xf32>
    %9 = arith.mulf %1, %1 : vector<8x32xf32>
    %cst_5 = arith.constant dense<0.000000e+00> : vector<8xf32>
    %10 = vector.multi_reduction <add>, %9, %cst_5 [1] : vector<8x32xf32> to vector<8xf32>
    %11 = vector.shape_cast %10 : vector<8xf32> to vector<8x1xf32>
    %12 = math.rsqrt %11 : vector<8x1xf32>
    %13 = vector.broadcast %12 : vector<8x1xf32> to vector<8x32xf32>
    %14 = arith.mulf %1, %13 : vector<8x32xf32>
    %c0_6 = arith.constant 0 : index
    %c0_7 = arith.constant 0 : index
    %15 = vector.load %arg4[%c0_6, %c0_7] : memref<3x32xf32, #tpu.memory_space<vmem>>, vector<1x32xf32>
    %c1 = arith.constant 1 : index
    %c0_8 = arith.constant 0 : index
    %16 = vector.load %arg4[%c1, %c0_8] : memref<3x32xf32, #tpu.memory_space<vmem>>, vector<1x32xf32>
    %c2 = arith.constant 2 : index
    %c0_9 = arith.constant 0 : index
    %17 = vector.load %arg4[%c2, %c0_9] : memref<3x32xf32, #tpu.memory_space<vmem>>, vector<1x1xf32>
    %18 = tpu.concatenate %14, %8 in 1 : vector<8x32xf32>, vector<8x32xf32> -> vector<8x64xf32>
    %c0_10 = arith.constant 0 : index
    %c0_11 = arith.constant 0 : index
    %19 = vector.load %arg3[%c0_10, %c0_11] : memref<64x32xf32, #tpu.memory_space<vmem>>, vector<64x32xf32>
    %cst_12 = arith.constant dense<0.000000e+00> : vector<8x32xf32>
    %20 = tpu.matmul %18, %19, %cst_12 {dimension_numbers = #tpu.dot_dimension_numbers<[1], [0], [0], [1], [0, 0, 1, 1], [], []>} : vector<8x64xf32>, vector<64x32xf32>, vector<8x32xf32> -> vector<8x32xf32>
    %21 = vector.broadcast %15 : vector<1x32xf32> to vector<8x32xf32>
    %22 = arith.addf %20, %21 : vector<8x32xf32>
    %cst_13 = arith.constant 0.000000e+00 : f32
    %23 = vector.broadcast %cst_13 : f32 to vector<8x32xf32>
    %24 = arith.maximumf %22, %23 : vector<8x32xf32>
    %25 = vector.broadcast %16 : vector<1x32xf32> to vector<8x32xf32>
    %26 = arith.mulf %24, %25 : vector<8x32xf32>
    %cst_14 = arith.constant dense<0.000000e+00> : vector<8xf32>
    %27 = vector.multi_reduction <add>, %26, %cst_14 [1] : vector<8x32xf32> to vector<8xf32>
    %28 = vector.shape_cast %27 : vector<8xf32> to vector<8x1xf32>
    %29 = vector.broadcast %17 : vector<1x1xf32> to vector<8x1xf32>
    %30 = arith.addf %28, %29 : vector<8x1xf32>
    %31 = arith.negf %30 : vector<8x1xf32>
    %32 = math.exp %31 : vector<8x1xf32>
    %cst_15 = arith.constant 1.000000e+00 : f32
    %33 = vector.broadcast %cst_15 : f32 to vector<8x1xf32>
    %34 = arith.addf %33, %32 : vector<8x1xf32>
    %35 = arith.divf %33, %34 : vector<8x1xf32>
    %c0_16 = arith.constant 0 : index
    %c0_17 = arith.constant 0 : index
    %36 = vector.load %arg5[%c0_16, %c0_17] : memref<8x1xf32, #tpu.memory_space<vmem>>, vector<8x1xf32>
    tpu.vector_store %arg5[%c0_16, %c0_17], %35 {strides = array<i32>} : memref<8x1xf32, #tpu.memory_space<vmem>>, vector<8x1xf32>,
    return
  }
  func.func @transform_0(%arg0: i32) -> (i32, i32, i32) {
    %c0_i32 = arith.constant 0 : i32
    %c0_i32_0 = arith.constant 0 : i32
    %c0_i32_1 = arith.constant 0 : i32
    return %arg0, %c0_i32, %c0_i32_0 : i32, i32, i32
  }
  func.func @transform_1(%arg0: i32) -> (i32, i32) {
    %c0_i32 = arith.constant 0 : i32
    %c0_i32_0 = arith.constant 0 : i32
    return %arg0, %c0_i32 : i32, i32
  }
  func.func @transform_2(%arg0: i32) -> (i32, i32) {
    %c0_i32 = arith.constant 0 : i32
    %c0_i32_0 = arith.constant 0 : i32
    %c0_i32_1 = arith.constant 0 : i32
    return %c0_i32, %c0_i32_0 : i32, i32
  }
  func.func @transform_3(%arg0: i32) -> (i32, i32) {
    %c0_i32 = arith.constant 0 : i32
    %c0_i32_0 = arith.constant 0 : i32
    %c0_i32_1 = arith.constant 0 : i32
    return %c0_i32, %c0_i32_0 : i32, i32
  }
  func.func @transform_4(%arg0: i32) -> (i32, i32) {
    %c0_i32 = arith.constant 0 : i32
    %c0_i32_0 = arith.constant 0 : i32
    return %arg0, %c0_i32 : i32, i32
  }
}

</mosaic_0001>

<llo_original>
// kernel: tpu_custom_call.1
$region0: #{tpu_custom_call.1}
  #allocation0 [shape = 'u32[]', space=smem, size = 0x4, offset = 0x4, fixed_abs, tag = 'smem constant byte address 0x4 - core index']
  #allocation1 [shape = 'u32[144,128]{1,0:T(1,128)}', space=vmem, size = 0x12000, scoped, tag = 'internal scratch']
  %s0 = inlined_call_operand.vmem [shape: f32[8,8,32], index: 0, kind: input, shape index: {}]
  %s1 = inlined_call_operand.vmem [shape: f32[8,32], index: 1, kind: input, shape index: {}]
  %s2 = inlined_call_operand.vmem [shape: f32[64,32], index: 2, kind: input, shape index: {}]
  %s3 = inlined_call_operand.vmem [shape: f32[3,32], index: 3, kind: input, shape index: {}]
  %s4 = inlined_call_operand.vmem [shape: f32[8,1], index: 4, kind: output, shape index: {}]
  %s5 = sld [smem:[#allocation0]]
  $region26: #{tpu_custom_call.1} parent=0
    _
  %s7 = ssub.s32 1, %s5
  %s8 = scalar_select 0, %s7, %s5
  // Predicated region
  $region2: #{tpu_custom_call.1} parent=0 // pred_check
    _
  $region3: #{tpu_custom_call.1} parent=0 // pred_check_branch
    %10 = sbr.rel (0) target = $region5
  $region4: #{tpu_custom_call.1} parent=0 // pred_region
    _
  $region5: #{tpu_custom_call.1} parent=0 // pred_fallthru
    _
  // Predicated region
  $region6: #{tpu_custom_call.1} parent=0 // pred_check
    _
  $region7: #{tpu_custom_call.1} parent=0 // pred_check_branch
    %12 = sbr.rel (0) target = $region9
  $region8: #{tpu_custom_call.1} parent=0 // pred_region
    _
  $region9: #{tpu_custom_call.1} parent=0 // pred_fallthru
    _
  // Predicated region
  $region10: #{tpu_custom_call.1} parent=0 // pred_check
    _
  $region11: #{tpu_custom_call.1} parent=0 // pred_check_branch
    %14 = sbr.rel (0) target = $region13
  $region12: #{tpu_custom_call.1} parent=0 // pred_region
    _
  $region13: #{tpu_custom_call.1} parent=0 // pred_fallthru
    _
  // Predicated region
  $region14: #{tpu_custom_call.1} parent=0 // pred_check
    _
  $region15: #{tpu_custom_call.1} parent=0 // pred_check_branch
    %16 = sbr.rel (0) target = $region17
  $region16: #{tpu_custom_call.1} parent=0 // pred_region
    _
  $region17: #{tpu_custom_call.1} parent=0 // pred_fallthru
    _
  %v17 = vld [vmem:[%s0] sm:$0xff]
  %v18 = vld [vmem:[%s0 + $0x8] sm:$0xff]
  %v19 = vld [vmem:[%s0 + $0x10] sm:$0xff]
  %v20 = vld [vmem:[%s0 + $0x18] sm:$0xff]
  %v21 = vld [vmem:[%s0 + $0x20] sm:$0xff]
  %v22 = vld [vmem:[%s0 + $0x28] sm:$0xff]
  %v23 = vld [vmem:[%s0 + $0x30] sm:$0xff]
  %v24 = vld [vmem:[%s0 + $0x38] sm:$0xff]
  %v25 = vld [vmem:[%s1] sm:$0xff]
  %vm26 = vcmask 261120
  %v27 = vsel %vm26, %v17, 0.0
  %v28 = vrot.slane %v27, 4
  %v29 = vadd.f32 %v27, %v28
  %v30 = vrot.slane %v29, 2
  %v31 = vadd.f32 %v29, %v30
  %v32 = vrot.slane %v31, 1
  %v33 = vadd.f32 %v31, %v32
  %v34 = vsel %vm26, %v18, 0.0
  %v35 = vrot.slane %v34, 4
  %v36 = vadd.f32 %v34, %v35
  %v37 = vrot.slane %v36, 2
  %v38 = vadd.f32 %v36, %v37
  %v39 = vrot.slane %v38, 1
  %v40 = vadd.f32 %v38, %v39
  %v41 = vsel %vm26, %v19, 0.0
  %v42 = vrot.slane %v41, 4
  %v43 = vadd.f32 %v41, %v42
  %v44 = vrot.slane %v43, 2
  %v45 = vadd.f32 %v43, %v44
  %v46 = vrot.slane %v45, 1
  %v47 = vadd.f32 %v45, %v46
  %v48 = vsel %vm26, %v20, 0.0
  %v49 = vrot.slane %v48, 4
  %v50 = vadd.f32 %v48, %v49
  %v51 = vrot.slane %v50, 2
  %v52 = vadd.f32 %v50, %v51
  %v53 = vrot.slane %v52, 1
  %v54 = vadd.f32 %v52, %v53
  %v55 = vsel %vm26, %v21, 0.0
  %v56 = vrot.slane %v55, 4
  %v57 = vadd.f32 %v55, %v56
  %v58 = vrot.slane %v57, 2
  %v59 = vadd.f32 %v57, %v58
  %v60 = vrot.slane %v59, 1
  %v61 = vadd.f32 %v59, %v60
  %v62 = vsel %vm26, %v22, 0.0
  %v63 = vrot.slane %v62, 4
  %v64 = vadd.f32 %v62, %v63
  %v65 = vrot.slane %v64, 2
  %v66 = vadd.f32 %v64, %v65
  %v67 = vrot.slane %v66, 1
  %v68 = vadd.f32 %v66, %v67
  %v69 = vsel %vm26, %v23, 0.0
  %v70 = vrot.slane %v69, 4
  %v71 = vadd.f32 %v69, %v70
  %v72 = vrot.slane %v71, 2
  %v73 = vadd.f32 %v71, %v72
  %v74 = vrot.slane %v73, 1
  %v75 = vadd.f32 %v73, %v74
  %v76 = vsel %vm26, %v24, 0.0
  %v77 = vrot.slane %v76, 4
  %v78 = vadd.f32 %v76, %v77
  %v79 = vrot.slane %v78, 2
  %v80 = vadd.f32 %v78, %v79
  %v81 = vrot.slane %v80, 1
  %v82 = vadd.f32 %v80, %v81
  %v83 = vmul.f32 %v33, %v33
  %v84 = vmul.f32 %v40, %v40
  %v85 = vmul.f32 %v47, %v47
  %v86 = vmul.f32 %v54, %v54
  %v87 = vmul.f32 %v61, %v61
  %v88 = vmul.f32 %v68, %v68
  %v89 = vmul.f32 %v75, %v75
  %v90 = vmul.f32 %v82, %v82
  %vm99 = vcmask 1041409
  %v100 = vsel %vm99, %v84, %v83
  %vm101 = vcmask 1042434
  %v102 = vsel %vm101, %v85, %v100
  %vm103 = vcmask 1043459
  %v104 = vsel %vm103, %v86, %v102
  %vm105 = vcmask 1044484
  %v106 = vsel %vm105, %v87, %v104
  %vm107 = vcmask 1045509
  %v108 = vsel %vm107, %v88, %v106
  %vm109 = vcmask 1046534
  %v110 = vsel %vm109, %v89, %v108
  %vm111 = vcmask 1047559
  %v112 = vsel %vm111, %v90, %v110
  %v114 = vsel %vm26, %v112, 0.0
  %115 = vadd.xlane.f32.xlu0 %v114
  %v116 = vpop.xlane.xlu0 %115
  %v117 = vrsqrt.pop %v116
  %v119 = vrot.slane %v117, 1
  %v120 = vrot.slane %v117, 2
  %v121 = vrot.slane %v117, 3
  %v122 = vrot.slane %v117, 4
  %v123 = vrot.slane %v117, 5
  %v124 = vrot.slane %v117, 6
  %v125 = vrot.slane %v117, 7
  %v134 = vmul.f32 %v33, %v117
  %v135 = vmul.f32 %v40, %v119
  %v136 = vmul.f32 %v47, %v120
  %v137 = vmul.f32 %v54, %v121
  %v138 = vmul.f32 %v61, %v122
  %v139 = vmul.f32 %v68, %v123
  %v140 = vmul.f32 %v75, %v124
  %v141 = vmul.f32 %v82, %v125
  %v142 = vmul.f32 %v25, %v25
  %v143 = vsel %vm26, %v142, 0.0
  %144 = vadd.xlane.f32.xlu0 %v143
  %v145 = vpop.xlane.xlu0 %144
  %v146 = vrsqrt.pop %v145
  %v147 = vmul.f32 %v25, %v146
  %v148 = vld [vmem:[%s3] sm:$0x1]
  %v149 = vld [vmem:[%s3 + $0x1] sm:$0x1]
  %v150 = vld [vmem:[%s3 + $0x2] sm:$0x1]
  %v159 = vrot.slane %v135, 7
  %v160 = vsel %vm99, %v159, %v134
  %v161 = vrot.slane %v136, 6
  %v162 = vsel %vm101, %v161, %v160
  %v163 = vrot.slane %v137, 5
  %v164 = vsel %vm103, %v163, %v162
  %v165 = vrot.slane %v138, 4
  %v166 = vsel %vm105, %v165, %v164
  %v167 = vrot.slane %v139, 3
  %v168 = vsel %vm107, %v167, %v166
  %v169 = vrot.slane %v140, 2
  %v170 = vsel %vm109, %v169, %v168
  %v171 = vrot.slane %v141, 1
  %v172 = vsel %vm111, %v171, %v170
  %173 = vrot.lane.b32.xlu0 %v172, 32
  %v174 = vpop.permute.xlu0 %173
  %v176 = vsel %vm26, %v147, %v174
  %v177 = vld [vmem:[%s2] sm:$0xff]
  %v178 = vld [vmem:[%s2 + $0x8] sm:$0xff]
  %v179 = vld [vmem:[%s2 + $0x10] sm:$0xff]
  %v180 = vld [vmem:[%s2 + $0x18] sm:$0xff]
  %v181 = vld [vmem:[%s2 + $0x20] sm:$0xff]
  %v182 = vld [vmem:[%s2 + $0x28] sm:$0xff]
  %v183 = vld [vmem:[%s2 + $0x30] sm:$0xff]
  %v184 = vld [vmem:[%s2 + $0x38] sm:$0xff]
  %v185 = vlaneseq
  %v186 = vshrl.u32 %v185, 7
  %v187 = vsub.s32 0, %v186
  %v188 = vrot.slane %v148, %v187
  %vm189 = vcmask 523264
  %v191 = vsel %vm189, %v176, 0
  %193 = vmatprep.subr.mxu0 0.0
  %194 = vmatpush1.msra.mxu0 %v177
  %195 = vmatprep.subr.mxu0 0.0
  %196 = vmatpush1.msra.mxu0 %v178
  %197 = vmatprep.subr.mxu0 0.0
  %198 = vmatpush1.msra.mxu0 %v179
  %199 = vmatprep.subr.mxu0 0.0
  %200 = vmatpush1.msra.mxu0 %v180
  %201 = vmatprep.subr.mxu0 0.0
  %202 = vmatpush1.msra.mxu0 %v181
  %203 = vmatprep.subr.mxu0 0.0
  %204 = vmatpush1.msra.mxu0 %v182
  %205 = vmatprep.subr.mxu0 0.0
  %206 = vmatpush1.msra.mxu0 %v183
  %207 = vmatprep.subr.mxu0 0.0
  %208 = vmatpush1.msra.mxu0 %v184
  %209 = vmatprep.subr.mxu0 0.0
  %210 = vmatpush1.msra.mxu0 0.0
  %211 = vmatprep.subr.mxu0 0.0
  %212 = vmatpush1.msra.mxu0 0.0
  %213 = vmatprep.subr.mxu0 0.0
  %214 = vmatpush1.msra.mxu0 0.0
  %215 = vmatprep.subr.mxu0 0.0
  %216 = vmatpush1.msra.mxu0 0.0
  %217 = vmatprep.subr.mxu0 0.0
  %218 = vmatpush1.msra.mxu0 0.0
  %219 = vmatprep.subr.mxu0 0.0
  %220 = vmatpush1.msra.mxu0 0.0
  %221 = vmatprep.subr.mxu0 0.0
  %222 = vmatpush1.msra.mxu0 0.0
  %223 = vmatprep.subr.mxu0 0.0
  %224 = vmatpush1.msra.mxu0 0.0
  %225 = vmatprep.subr.mxu0 0.0
  %226 = vmatpush1.msra.mxu0 0.0
  %227 = vmatprep.subr.mxu0 0.0
  %228 = vmatpush1.msra.mxu0 0.0
  %229 = vmatprep.subr.mxu0 0.0
  %230 = vmatpush1.msra.mxu0 0.0
  %231 = vmatprep.subr.mxu0 0.0
  %232 = vmatpush1.msra.mxu0 0.0
  %233 = vmatprep.subr.mxu0 0.0
  %234 = vmatpush1.msra.mxu0 0.0
  %235 = vmatprep.subr.mxu0 0.0
  %236 = vmatpush1.msra.mxu0 0.0
  %237 = vmatprep.subr.mxu0 0.0
  %238 = vmatpush1.msra.mxu0 0.0
  %239 = vmatprep.subr.mxu0 0.0
  %240 = vmatpush1.msra.mxu0 0.0
  %241 = vmatprep.subr.mxu0 0.0
  %242 = vmatpush1.msra.mxu0 0.0
  %243 = vmatprep.subr.mxu0 0.0
  %244 = vmatpush1.msra.mxu0 0.0
  %245 = vmatprep.subr.mxu0 0.0
  %246 = vmatpush1.msra.mxu0 0.0
  %247 = vmatprep.subr.mxu0 0.0
  %248 = vmatpush1.msra.mxu0 0.0
  %249 = vmatprep.subr.mxu0 0.0
  %250 = vmatpush1.msra.mxu0 0.0
  %251 = vmatprep.subr.mxu0 0.0
  %252 = vmatpush1.msra.mxu0 0.0
  %253 = vmatprep.subr.mxu0 0.0
  %254 = vmatpush1.msra.mxu0 0.0
  %255 = vmatprep.subr.mxu0 0.0
  %256 = vmatpush1.msra.mxu0 0.0
  %257 = vmatprep.mubr.f32.mxu0 0.0
  %258 = vmatmul.mubr.f32.gmra.mrb[0].mxu0 %v191
  %v259 = vpop.f32.mrb[0].mxu0
  %v260 = vadd.f32 %v188, %v259
  %v261 = vpop.f32.mrb[0].mxu0
  %262 = vdwg.mxu0
  %v263 = vmax.f32 %v260, 0.0
  %v264 = vlaneseq
  %v265 = vshrl.u32 %v264, 7
  %v266 = vsub.s32 0, %v265
  %v267 = vrot.slane %v149, %v266
  %v268 = vmul.f32 %v263, %v267
  %v269 = vsel %vm26, %v268, 0.0
  %270 = vadd.xlane.f32.xlu0 %v269
  %v271 = vpop.xlane.xlu0 %270
  %v272 = vlaneseq
  %v273 = vshrl.u32 %v272, 7
  %v274 = vsub.s32 0, %v273
  %v275 = vrot.slane %v150, %v274
  %v276 = vadd.f32 %v271, %v275
  %v277 = vxor.u32 %v276, 2147483648
  %v278 = vmul.f32 %v277, 1.442695
  %v279 = vpow.pop %v278
  %v280 = vadd.f32 %v279, 1.0
  %v281 = vrcp.pop %v280
  %v282 = vmul.f32 1.0, %v281
  %vm283 = vcmask 7168
  %284 = vst.msk [vmem:[%s4] sm:$0xff] %vm283, %v282
  // Predicated region
  $region18: #{tpu_custom_call.1} parent=0 // pred_check
    _
  $region19: #{tpu_custom_call.1} parent=0 // pred_check_branch
    %286 = sbr.rel (0) target = $region21
  $region20: #{tpu_custom_call.1} parent=0 // pred_region
    _
  $region21: #{tpu_custom_call.1} parent=0 // pred_fallthru
    _
  // Predicated region
  $region22: #{tpu_custom_call.1} parent=0 // pred_check
    _
  $region23: #{tpu_custom_call.1} parent=0 // pred_check_branch
    %288 = sbr.rel (0) target = $region25
  $region24: #{tpu_custom_call.1} parent=0 // pred_region
    _
  $region25: #{tpu_custom_call.1} parent=0 // pred_fallthru
    _

</llo_original>
